<compile_context>
chip_gen: v7x
topology: tpu7x:2x2x1
jax: 0.10.0
libtpu: 0.0.40
codegen_flags: <defaults>
</compile_context>

<pallas_src>
import jax
import jax.numpy as jnp
from jax.experimental import pallas as pl
from jax.experimental.pallas import tpu as pltpu


_SUBLANES = 8


def _round_up(n, m):
    return ((n + m - 1) // m) * m


def _pick_bm(batch, n_feat):
    """Row-tile size: multiple of 8, large enough to amortize the ~0.35us grid-step
    overhead, small enough to fit comfortably in default scoped VMEM, and leaving
    >= 4 grid steps when the batch allows (2 pipelined steps per v7x TensorCore)."""
    # Working set per step ~ 7 * bm * n_feat * 4 bytes (double-buffered c, x, out
    # f32 tiles + live activation); keep it under ~6 MiB.
    vmem_rows = (6 << 20) // (7 * 4 * max(n_feat, 1))
    cap = max(_SUBLANES, min(2048, vmem_rows - vmem_rows % _SUBLANES))
    want = _round_up(max(pl.cdiv(batch, 4), _SUBLANES), _SUBLANES)
    return min(cap, want)


def _make_denoise_kernel(n_extra_layers, inv_max_period, mm_dtype, slope=0.1):
    """Kernel args: c, t, x, Wc, Wt, Wx, b0, (W1, b1, ..., Wn, bn), out."""

    def kernel(c_ref, t_ref, x_ref, wc_ref, wt_ref, wx_ref, b0_ref, *refs):
        out_ref = refs[-1]
        params = refs[:-1]                       # W1, b1, ..., Wn, bn

        # --- fused first layer: [c | t | x] @ W0 + b0 (W0 pre-split) ---
        # Input casts to the matmul dtype happen here (VPU cast hidden under DMA).
        h = jnp.dot(c_ref[...].astype(mm_dtype), wc_ref[...],
                    preferred_element_type=jnp.float32)
        h = h + jnp.dot(x_ref[...].astype(mm_dtype), wx_ref[...],
                        preferred_element_type=jnp.float32)
        t = t_ref[...].astype(jnp.float32) * inv_max_period   # t.float()/max_period
        h = h + t * wt_ref[...]                  # rank-1 term = K=1 slice of W0
        h = h + b0_ref[...]
        h = jnp.where(h > 0, h, slope * h)       # LeakyReLU(0.1), f32

        # --- remaining Linear + LeakyReLU layers (unrolled, natural width) ---
        for li in range(n_extra_layers):
            w = params[2 * li][...]
            b = params[2 * li + 1][...]
            h = jnp.dot(h.astype(w.dtype), w, preferred_element_type=jnp.float32)
            h = h + b
            h = jnp.where(h > 0, h, slope * h)

        out_ref[...] = h.astype(out_ref.dtype)

    return kernel


def prepare_denoise_params(weights, biases, max_period, *, use_bf16=True):
    """One-time parameter repack; call at model setup, NOT per forward call."""
    n_layers = len(weights)
    d_in0, f_out = weights[0].shape
    f_in = (d_in0 - 1) // 2
    assert d_in0 == 2 * f_in + 1, "first weight must have 2*F+1 input features"
    mm_dtype = jnp.bfloat16 if use_bf16 else jnp.float32

    as_bias = lambda a: jnp.asarray(a, jnp.float32).reshape(1, -1)
    w0 = jnp.asarray(weights[0])

    extra = []
    for w, b in zip(weights[1:], biases[1:]):
        extra.append(jnp.asarray(w, mm_dtype))       # (F, F), natural shape
        extra.append(as_bias(b))                     # (1, F), f32

    return dict(
        wc=w0[:f_in, :].astype(mm_dtype),            # (F, F_out)
        wt=w0[f_in:f_in + 1, :].astype(jnp.float32),  # (1, F_out), kept f32
        wx=w0[f_in + 1:, :].astype(mm_dtype),        # (F, F_out)
        b0=as_bias(biases[0]),                       # (1, F_out), f32
        extra=extra,
        f_in=f_in, f_out=f_out, n_layers=n_layers,
        mm_dtype=mm_dtype, max_period=float(max_period),
    )


def denoise_apply(params, x, t, c, *, bm=None, out_dtype=jnp.float32):
    """Per-call forward. x, c: (B, F) any float dtype; t: (B,) or (B,1) ids."""
    B, f_in = x.shape
    assert f_in == params["f_in"] and c.shape == (B, f_in)
    f_out = params["f_out"]
    n_layers = params["n_layers"]
    mm_dtype = params["mm_dtype"]

    t_col = jnp.asarray(t).reshape(-1, 1)            # raw dtype; cast fused in-kernel
    assert t_col.shape[0] == B

    if bm is None:
        bm = _pick_bm(B, max(f_in, f_out))
    b_pad = _round_up(B, bm)
    if b_pad != B:                                    # pad ragged batch (few rows)
        pad = ((0, b_pad - B), (0, 0))
        x, c, t_col = jnp.pad(x, pad), jnp.pad(c, pad), jnp.pad(t_col, pad)

    kernel = _make_denoise_kernel(n_layers - 1, 1.0 / params["max_period"],
                                  mm_dtype)

    row = lambda i: (i, 0)
    const = lambda i: (0, 0)
    in_specs = [
        pl.BlockSpec((bm, f_in), row),                # c
        pl.BlockSpec((bm, 1), row),                   # t column (raw dtype)
        pl.BlockSpec((bm, f_in), row),                # x
        pl.BlockSpec(params["wc"].shape, const),      # W0 rows for c
        pl.BlockSpec(params["wt"].shape, const),      # W0 row for t
        pl.BlockSpec(params["wx"].shape, const),      # W0 rows for x
        pl.BlockSpec(params["b0"].shape, const),      # b0
    ]
    for p in params["extra"]:
        in_specs.append(pl.BlockSpec(p.shape, const))

    weight_bytes = sum(int(p.size) * p.dtype.itemsize for p in
                       [params["wc"], params["wt"], params["wx"], params["b0"],
                        *params["extra"]])
    flops = 2 * b_pad * ((2 * f_in + 1) * f_out + (n_layers - 1) * f_out * f_out)
    bytes_accessed = (int(x.size) * x.dtype.itemsize
                      + int(c.size) * c.dtype.itemsize
                      + int(t_col.size) * t_col.dtype.itemsize
                      + b_pad * f_out * jnp.dtype(out_dtype).itemsize
                      + weight_bytes)

    out = pl.pallas_call(
        kernel,
        out_shape=jax.ShapeDtypeStruct((b_pad, f_out), out_dtype),
        grid=(b_pad // bm,),
        in_specs=in_specs,
        out_specs=pl.BlockSpec((bm, f_out), row),
        compiler_params=pltpu.CompilerParams(
            dimension_semantics=("parallel",)),
        cost_estimate=pl.CostEstimate(
            flops=flops, transcendentals=0, bytes_accessed=bytes_accessed),
    )(c, t_col, x, params["wc"], params["wt"], params["wx"], params["b0"],
      *params["extra"])

    return out if b_pad == B else out[:B]


def denoise_forward(x, t, c, weights, biases, max_period, *, bm=None,
                    use_bf16=True, out_dtype=jnp.float32):
    """Convenience one-shot wrapper (prefer prepare_denoise_params + denoise_apply
    so the parameter repack is not on the per-call path)."""
    params = prepare_denoise_params(weights, biases, max_period,
                                    use_bf16=use_bf16)
    return denoise_apply(params, x, t, c, bm=bm, out_dtype=out_dtype)


def denoise_ref(x, t, c, weights, biases, max_period):
    """Pure-JAX reference matching the torch forward."""
    t = (t.astype(jnp.float32) / float(max_period)).reshape(-1, 1)
    h = jnp.concatenate(
        [c.astype(jnp.float32), t, x.astype(jnp.float32)], axis=1)
    for w, b in zip(weights, biases):
        h = h @ w + jnp.reshape(b, (1, -1))
        h = jnp.where(h > 0, h, 0.1 * h)
    return h


if __name__ == "__main__":
    # Small shapes consistent with the module's forward:
    #   n_feats=8 -> n_featsx4=32, concat dim = 2*32 + 1 = 65, 6 Linear layers.
    n_feats = 8
    n_denoise_res = 5
    timesteps = 5
    max_period = timesteps * 10
    F4 = 4 * n_feats          # 32
    B = 8

    key = jax.random.PRNGKey(0)
    n_layers = n_denoise_res + 1
    keys = jax.random.split(key, 3 + 2 * n_layers)

    x = jax.random.normal(keys[0], (B, F4), dtype=jnp.float32)
    c = jax.random.normal(keys[1], (B, F4), dtype=jnp.float32)
    t = jax.random.randint(keys[2], (B,), 0, timesteps)   # int timestep ids

    # Deterministic parameter init (uniform +-1/sqrt(fan_in), like nn.Linear).
    dims_in = [2 * F4 + 1] + [F4] * n_denoise_res
    weights, biases = [], []
    for li, din in enumerate(dims_in):
        bound = 1.0 / (din ** 0.5)
        weights.append(jax.random.uniform(
            keys[3 + 2 * li], (din, F4), jnp.float32, -bound, bound))
        biases.append(jax.random.uniform(
            keys[4 + 2 * li], (1, F4), jnp.float32, -bound, bound))

    ref = denoise_ref(x, t, c, weights, biases, max_period)

    # f32 path: tight check against the reference (params prepared once).
    params_f32 = prepare_denoise_params(weights, biases, max_period,
                                        use_bf16=False)
    out_f32 = jax.block_until_ready(denoise_apply(params_f32, x, t, c))
    assert out_f32.shape == (B, F4), out_f32.shape
    assert jnp.allclose(out_f32, ref, atol=1e-5, rtol=1e-5), \
        float(jnp.max(jnp.abs(out_f32 - ref)))

    # bf16-matmul path (default; MXU-native on v6e/v7x, f32 accumulation).
    params_bf16 = prepare_denoise_params(weights, biases, max_period,
                                         use_bf16=True)
    out_bf16 = jax.block_until_ready(denoise_apply(params_bf16, x, t, c))
    assert out_bf16.shape == (B, F4), out_bf16.shape
    assert jnp.allclose(out_bf16, ref, atol=5e-2, rtol=5e-2), \
        float(jnp.max(jnp.abs(out_bf16 - ref)))

    # Ragged batch (B % 8 != 0): exercises the wrapper-side row padding path.
    Br = 6
    out_ragged = jax.block_until_ready(
        denoise_apply(params_f32, x[:Br], t[:Br], c[:Br]))
    assert out_ragged.shape == (Br, F4), out_ragged.shape
    assert jnp.allclose(out_ragged, ref[:Br], atol=1e-5, rtol=1e-5), \
        float(jnp.max(jnp.abs(out_ragged - ref[:Br])))

    print("KERNEL_OK")
</pallas_src>

<mosaic_0001>
module attributes {stable_mosaic.version = 11 : i64} {
  func.func @kernel(%arg0: i32, %arg1: memref<8x32xf32, #tpu.memory_space<vmem>>, %arg2: memref<8x1xi32, #tpu.memory_space<vmem>>, %arg3: memref<8x32xf32, #tpu.memory_space<vmem>>, %arg4: memref<32x32xf32, #tpu.memory_space<vmem>>, %arg5: memref<1x32xf32, #tpu.memory_space<vmem>>, %arg6: memref<32x32xf32, #tpu.memory_space<vmem>>, %arg7: memref<1x32xf32, #tpu.memory_space<vmem>>, %arg8: memref<32x32xf32, #tpu.memory_space<vmem>>, %arg9: memref<1x32xf32, #tpu.memory_space<vmem>>, %arg10: memref<32x32xf32, #tpu.memory_space<vmem>>, %arg11: memref<1x32xf32, #tpu.memory_space<vmem>>, %arg12: memref<32x32xf32, #tpu.memory_space<vmem>>, %arg13: memref<1x32xf32, #tpu.memory_space<vmem>>, %arg14: memref<32x32xf32, #tpu.memory_space<vmem>>, %arg15: memref<1x32xf32, #tpu.memory_space<vmem>>, %arg16: memref<32x32xf32, #tpu.memory_space<vmem>>, %arg17: memref<1x32xf32, #tpu.memory_space<vmem>>, %arg18: memref<8x32xf32, #tpu.memory_space<vmem>>) attributes {dimension_semantics = [#tpu.dimension_semantics<parallel>], iteration_bounds = array<i64: 1>, scalar_prefetch = 0 : i64, scratch_operands = 0 : i64, tpu.core_type = #tpu.core_type<tc>, window_params = [{transform_indices = @transform_0, window_bounds = array<i64: 8, 32>}, {transform_indices = @transform_1, window_bounds = array<i64: 8, 1>}, {transform_indices = @transform_2, window_bounds = array<i64: 8, 32>}, {pipeline_mode = #tpu.pipeline_mode<synchronous>, transform_indices = @transform_3, window_bounds = array<i64: 32, 32>}, {pipeline_mode = #tpu.pipeline_mode<synchronous>, transform_indices = @transform_4, window_bounds = array<i64: 1, 32>}, {pipeline_mode = #tpu.pipeline_mode<synchronous>, transform_indices = @transform_5, window_bounds = array<i64: 32, 32>}, {pipeline_mode = #tpu.pipeline_mode<synchronous>, transform_indices = @transform_6, window_bounds = array<i64: 1, 32>}, {pipeline_mode = #tpu.pipeline_mode<synchronous>, transform_indices = @transform_7, window_bounds = array<i64: 32, 32>}, {pipeline_mode = #tpu.pipeline_mode<synchronous>, transform_indices = @transform_8, window_bounds = array<i64: 1, 32>}, {pipeline_mode = #tpu.pipeline_mode<synchronous>, transform_indices = @transform_9, window_bounds = array<i64: 32, 32>}, {pipeline_mode = #tpu.pipeline_mode<synchronous>, transform_indices = @transform_10, window_bounds = array<i64: 1, 32>}, {pipeline_mode = #tpu.pipeline_mode<synchronous>, transform_indices = @transform_11, window_bounds = array<i64: 32, 32>}, {pipeline_mode = #tpu.pipeline_mode<synchronous>, transform_indices = @transform_12, window_bounds = array<i64: 1, 32>}, {pipeline_mode = #tpu.pipeline_mode<synchronous>, transform_indices = @transform_13, window_bounds = array<i64: 32, 32>}, {pipeline_mode = #tpu.pipeline_mode<synchronous>, transform_indices = @transform_14, window_bounds = array<i64: 1, 32>}, {pipeline_mode = #tpu.pipeline_mode<synchronous>, transform_indices = @transform_15, window_bounds = array<i64: 32, 32>}, {pipeline_mode = #tpu.pipeline_mode<synchronous>, transform_indices = @transform_16, window_bounds = array<i64: 1, 32>}, {transform_indices = @transform_17, window_bounds = array<i64: 8, 32>}]} {
    %c0 = arith.constant 0 : index
    %c0_0 = arith.constant 0 : index
    %0 = vector.load %arg1[%c0, %c0_0] : memref<8x32xf32, #tpu.memory_space<vmem>>, vector<8x32xf32>
    %c0_1 = arith.constant 0 : index
    %c0_2 = arith.constant 0 : index
    %1 = vector.load %arg4[%c0_1, %c0_2] : memref<32x32xf32, #tpu.memory_space<vmem>>, vector<32x32xf32>
    %cst = arith.constant dense<0.000000e+00> : vector<8x32xf32>
    %2 = tpu.matmul %0, %1, %cst {dimension_numbers = #tpu.dot_dimension_numbers<[1], [0], [0], [1], [0, 0, 1, 1], [], []>} : vector<8x32xf32>, vector<32x32xf32>, vector<8x32xf32> -> vector<8x32xf32>
    %c0_3 = arith.constant 0 : index
    %c0_4 = arith.constant 0 : index
    %3 = vector.load %arg3[%c0_3, %c0_4] : memref<8x32xf32, #tpu.memory_space<vmem>>, vector<8x32xf32>
    %c0_5 = arith.constant 0 : index
    %c0_6 = arith.constant 0 : index
    %4 = vector.load %arg6[%c0_5, %c0_6] : memref<32x32xf32, #tpu.memory_space<vmem>>, vector<32x32xf32>
    %cst_7 = arith.constant dense<0.000000e+00> : vector<8x32xf32>
    %5 = tpu.matmul %3, %4, %cst_7 {dimension_numbers = #tpu.dot_dimension_numbers<[1], [0], [0], [1], [0, 0, 1, 1], [], []>} : vector<8x32xf32>, vector<32x32xf32>, vector<8x32xf32> -> vector<8x32xf32>
    %6 = arith.addf %2, %5 : vector<8x32xf32>
    %c0_8 = arith.constant 0 : index
    %c0_9 = arith.constant 0 : index
    %7 = vector.load %arg2[%c0_8, %c0_9] : memref<8x1xi32, #tpu.memory_space<vmem>>, vector<8x1xi32>
    %8 = arith.sitofp %7 : vector<8x1xi32> to vector<8x1xf32>
    %cst_10 = arith.constant 2.000000e-02 : f32
    %9 = vector.broadcast %cst_10 : f32 to vector<8x1xf32>
    %10 = arith.mulf %8, %9 : vector<8x1xf32>
    %c0_11 = arith.constant 0 : index
    %c0_12 = arith.constant 0 : index
    %11 = vector.load %arg5[%c0_11, %c0_12] : memref<1x32xf32, #tpu.memory_space<vmem>>, vector<1x32xf32>
    %12 = vector.broadcast %10 : vector<8x1xf32> to vector<8x32xf32>
    %13 = vector.broadcast %11 : vector<1x32xf32> to vector<8x32xf32>
    %14 = arith.mulf %12, %13 : vector<8x32xf32>
    %15 = arith.addf %6, %14 : vector<8x32xf32>
    %c0_13 = arith.constant 0 : index
    %c0_14 = arith.constant 0 : index
    %16 = vector.load %arg7[%c0_13, %c0_14] : memref<1x32xf32, #tpu.memory_space<vmem>>, vector<1x32xf32>
    %17 = vector.broadcast %16 : vector<1x32xf32> to vector<8x32xf32>
    %18 = arith.addf %15, %17 : vector<8x32xf32>
    %cst_15 = arith.constant 0.000000e+00 : f32
    %19 = vector.broadcast %cst_15 : f32 to vector<8x32xf32>
    %20 = arith.cmpf ogt, %18, %19 : vector<8x32xf32>
    %cst_16 = arith.constant 1.000000e-01 : f32
    %21 = vector.broadcast %cst_16 : f32 to vector<8x32xf32>
    %22 = arith.mulf %21, %18 : vector<8x32xf32>
    %23 = arith.select %20, %18, %22 : vector<8x32xi1>, vector<8x32xf32>
    %c0_17 = arith.constant 0 : index
    %c0_18 = arith.constant 0 : index
    %24 = vector.load %arg8[%c0_17, %c0_18] : memref<32x32xf32, #tpu.memory_space<vmem>>, vector<32x32xf32>
    %c0_19 = arith.constant 0 : index
    %c0_20 = arith.constant 0 : index
    %25 = vector.load %arg9[%c0_19, %c0_20] : memref<1x32xf32, #tpu.memory_space<vmem>>, vector<1x32xf32>
    %cst_21 = arith.constant dense<0.000000e+00> : vector<8x32xf32>
    %26 = tpu.matmul %23, %24, %cst_21 {dimension_numbers = #tpu.dot_dimension_numbers<[1], [0], [0], [1], [0, 0, 1, 1], [], []>} : vector<8x32xf32>, vector<32x32xf32>, vector<8x32xf32> -> vector<8x32xf32>
    %27 = vector.broadcast %25 : vector<1x32xf32> to vector<8x32xf32>
    %28 = arith.addf %26, %27 : vector<8x32xf32>
    %cst_22 = arith.constant 0.000000e+00 : f32
    %29 = vector.broadcast %cst_22 : f32 to vector<8x32xf32>
    %30 = arith.cmpf ogt, %28, %29 : vector<8x32xf32>
    %cst_23 = arith.constant 1.000000e-01 : f32
    %31 = vector.broadcast %cst_23 : f32 to vector<8x32xf32>
    %32 = arith.mulf %31, %28 : vector<8x32xf32>
    %33 = arith.select %30, %28, %32 : vector<8x32xi1>, vector<8x32xf32>
    %c0_24 = arith.constant 0 : index
    %c0_25 = arith.constant 0 : index
    %34 = vector.load %arg10[%c0_24, %c0_25] : memref<32x32xf32, #tpu.memory_space<vmem>>, vector<32x32xf32>
    %c0_26 = arith.constant 0 : index
    %c0_27 = arith.constant 0 : index
    %35 = vector.load %arg11[%c0_26, %c0_27] : memref<1x32xf32, #tpu.memory_space<vmem>>, vector<1x32xf32>
    %cst_28 = arith.constant dense<0.000000e+00> : vector<8x32xf32>
    %36 = tpu.matmul %33, %34, %cst_28 {dimension_numbers = #tpu.dot_dimension_numbers<[1], [0], [0], [1], [0, 0, 1, 1], [], []>} : vector<8x32xf32>, vector<32x32xf32>, vector<8x32xf32> -> vector<8x32xf32>
    %37 = vector.broadcast %35 : vector<1x32xf32> to vector<8x32xf32>
    %38 = arith.addf %36, %37 : vector<8x32xf32>
    %cst_29 = arith.constant 0.000000e+00 : f32
    %39 = vector.broadcast %cst_29 : f32 to vector<8x32xf32>
    %40 = arith.cmpf ogt, %38, %39 : vector<8x32xf32>
    %cst_30 = arith.constant 1.000000e-01 : f32
    %41 = vector.broadcast %cst_30 : f32 to vector<8x32xf32>
    %42 = arith.mulf %41, %38 : vector<8x32xf32>
    %43 = arith.select %40, %38, %42 : vector<8x32xi1>, vector<8x32xf32>
    %c0_31 = arith.constant 0 : index
    %c0_32 = arith.constant 0 : index
    %44 = vector.load %arg12[%c0_31, %c0_32] : memref<32x32xf32, #tpu.memory_space<vmem>>, vector<32x32xf32>
    %c0_33 = arith.constant 0 : index
    %c0_34 = arith.constant 0 : index
    %45 = vector.load %arg13[%c0_33, %c0_34] : memref<1x32xf32, #tpu.memory_space<vmem>>, vector<1x32xf32>
    %cst_35 = arith.constant dense<0.000000e+00> : vector<8x32xf32>
    %46 = tpu.matmul %43, %44, %cst_35 {dimension_numbers = #tpu.dot_dimension_numbers<[1], [0], [0], [1], [0, 0, 1, 1], [], []>} : vector<8x32xf32>, vector<32x32xf32>, vector<8x32xf32> -> vector<8x32xf32>
    %47 = vector.broadcast %45 : vector<1x32xf32> to vector<8x32xf32>
    %48 = arith.addf %46, %47 : vector<8x32xf32>
    %cst_36 = arith.constant 0.000000e+00 : f32
    %49 = vector.broadcast %cst_36 : f32 to vector<8x32xf32>
    %50 = arith.cmpf ogt, %48, %49 : vector<8x32xf32>
    %cst_37 = arith.constant 1.000000e-01 : f32
    %51 = vector.broadcast %cst_37 : f32 to vector<8x32xf32>
    %52 = arith.mulf %51, %48 : vector<8x32xf32>
    %53 = arith.select %50, %48, %52 : vector<8x32xi1>, vector<8x32xf32>
    %c0_38 = arith.constant 0 : index
    %c0_39 = arith.constant 0 : index
    %54 = vector.load %arg14[%c0_38, %c0_39] : memref<32x32xf32, #tpu.memory_space<vmem>>, vector<32x32xf32>
    %c0_40 = arith.constant 0 : index
    %c0_41 = arith.constant 0 : index
    %55 = vector.load %arg15[%c0_40, %c0_41] : memref<1x32xf32, #tpu.memory_space<vmem>>, vector<1x32xf32>
    %cst_42 = arith.constant dense<0.000000e+00> : vector<8x32xf32>
    %56 = tpu.matmul %53, %54, %cst_42 {dimension_numbers = #tpu.dot_dimension_numbers<[1], [0], [0], [1], [0, 0, 1, 1], [], []>} : vector<8x32xf32>, vector<32x32xf32>, vector<8x32xf32> -> vector<8x32xf32>
    %57 = vector.broadcast %55 : vector<1x32xf32> to vector<8x32xf32>
    %58 = arith.addf %56, %57 : vector<8x32xf32>
    %cst_43 = arith.constant 0.000000e+00 : f32
    %59 = vector.broadcast %cst_43 : f32 to vector<8x32xf32>
    %60 = arith.cmpf ogt, %58, %59 : vector<8x32xf32>
    %cst_44 = arith.constant 1.000000e-01 : f32
    %61 = vector.broadcast %cst_44 : f32 to vector<8x32xf32>
    %62 = arith.mulf %61, %58 : vector<8x32xf32>
    %63 = arith.select %60, %58, %62 : vector<8x32xi1>, vector<8x32xf32>
    %c0_45 = arith.constant 0 : index
    %c0_46 = arith.constant 0 : index
    %64 = vector.load %arg16[%c0_45, %c0_46] : memref<32x32xf32, #tpu.memory_space<vmem>>, vector<32x32xf32>
    %c0_47 = arith.constant 0 : index
    %c0_48 = arith.constant 0 : index
    %65 = vector.load %arg17[%c0_47, %c0_48] : memref<1x32xf32, #tpu.memory_space<vmem>>, vector<1x32xf32>
    %cst_49 = arith.constant dense<0.000000e+00> : vector<8x32xf32>
    %66 = tpu.matmul %63, %64, %cst_49 {dimension_numbers = #tpu.dot_dimension_numbers<[1], [0], [0], [1], [0, 0, 1, 1], [], []>} : vector<8x32xf32>, vector<32x32xf32>, vector<8x32xf32> -> vector<8x32xf32>
    %67 = vector.broadcast %65 : vector<1x32xf32> to vector<8x32xf32>
    %68 = arith.addf %66, %67 : vector<8x32xf32>
    %cst_50 = arith.constant 0.000000e+00 : f32
    %69 = vector.broadcast %cst_50 : f32 to vector<8x32xf32>
    %70 = arith.cmpf ogt, %68, %69 : vector<8x32xf32>
    %cst_51 = arith.constant 1.000000e-01 : f32
    %71 = vector.broadcast %cst_51 : f32 to vector<8x32xf32>
    %72 = arith.mulf %71, %68 : vector<8x32xf32>
    %73 = arith.select %70, %68, %72 : vector<8x32xi1>, vector<8x32xf32>
    %c0_52 = arith.constant 0 : index
    %c0_53 = arith.constant 0 : index
    %74 = vector.load %arg18[%c0_52, %c0_53] : memref<8x32xf32, #tpu.memory_space<vmem>>, vector<8x32xf32>
    tpu.vector_store %arg18[%c0_52, %c0_53], %73 {strides = array<i32>} : memref<8x32xf32, #tpu.memory_space<vmem>>, vector<8x32xf32>,
    return
  }
  func.func @transform_0(%arg0: i32) -> (i32, i32) {
    %c0_i32 = arith.constant 0 : i32
    %c0_i32_0 = arith.constant 0 : i32
    return %arg0, %c0_i32 : i32, i32
  }
  func.func @transform_1(%arg0: i32) -> (i32, i32) {
    %c0_i32 = arith.constant 0 : i32
    %c0_i32_0 = arith.constant 0 : i32
    return %arg0, %c0_i32 : i32, i32
  }
  func.func @transform_2(%arg0: i32) -> (i32, i32) {
    %c0_i32 = arith.constant 0 : i32
    %c0_i32_0 = arith.constant 0 : i32
    return %arg0, %c0_i32 : i32, i32
  }
  func.func @transform_3(%arg0: i32) -> (i32, i32) {
    %c0_i32 = arith.constant 0 : i32
    %c0_i32_0 = arith.constant 0 : i32
    %c0_i32_1 = arith.constant 0 : i32
    return %c0_i32, %c0_i32_0 : i32, i32
  }
  func.func @transform_4(%arg0: i32) -> (i32, i32) {
    %c0_i32 = arith.constant 0 : i32
    %c0_i32_0 = arith.constant 0 : i32
    %c0_i32_1 = arith.constant 0 : i32
    return %c0_i32, %c0_i32_0 : i32, i32
  }
  func.func @transform_5(%arg0: i32) -> (i32, i32) {
    %c0_i32 = arith.constant 0 : i32
    %c0_i32_0 = arith.constant 0 : i32
    %c0_i32_1 = arith.constant 0 : i32
    return %c0_i32, %c0_i32_0 : i32, i32
  }
  func.func @transform_6(%arg0: i32) -> (i32, i32) {
    %c0_i32 = arith.constant 0 : i32
    %c0_i32_0 = arith.constant 0 : i32
    %c0_i32_1 = arith.constant 0 : i32
    return %c0_i32, %c0_i32_0 : i32, i32
  }
  func.func @transform_7(%arg0: i32) -> (i32, i32) {
    %c0_i32 = arith.constant 0 : i32
    %c0_i32_0 = arith.constant 0 : i32
    %c0_i32_1 = arith.constant 0 : i32
    return %c0_i32, %c0_i32_0 : i32, i32
  }
  func.func @transform_8(%arg0: i32) -> (i32, i32) {
    %c0_i32 = arith.constant 0 : i32
    %c0_i32_0 = arith.constant 0 : i32
    %c0_i32_1 = arith.constant 0 : i32
    return %c0_i32, %c0_i32_0 : i32, i32
  }
  func.func @transform_9(%arg0: i32) -> (i32, i32) {
    %c0_i32 = arith.constant 0 : i32
    %c0_i32_0 = arith.constant 0 : i32
    %c0_i32_1 = arith.constant 0 : i32
    return %c0_i32, %c0_i32_0 : i32, i32
  }
  func.func @transform_10(%arg0: i32) -> (i32, i32) {
    %c0_i32 = arith.constant 0 : i32
    %c0_i32_0 = arith.constant 0 : i32
    %c0_i32_1 = arith.constant 0 : i32
    return %c0_i32, %c0_i32_0 : i32, i32
  }
  func.func @transform_11(%arg0: i32) -> (i32, i32) {
    %c0_i32 = arith.constant 0 : i32
    %c0_i32_0 = arith.constant 0 : i32
    %c0_i32_1 = arith.constant 0 : i32
    return %c0_i32, %c0_i32_0 : i32, i32
  }
  func.func @transform_12(%arg0: i32) -> (i32, i32) {
    %c0_i32 = arith.constant 0 : i32
    %c0_i32_0 = arith.constant 0 : i32
    %c0_i32_1 = arith.constant 0 : i32
    return %c0_i32, %c0_i32_0 : i32, i32
  }
  func.func @transform_13(%arg0: i32) -> (i32, i32) {
    %c0_i32 = arith.constant 0 : i32
    %c0_i32_0 = arith.constant 0 : i32
    %c0_i32_1 = arith.constant 0 : i32
    return %c0_i32, %c0_i32_0 : i32, i32
  }
  func.func @transform_14(%arg0: i32) -> (i32, i32) {
    %c0_i32 = arith.constant 0 : i32
    %c0_i32_0 = arith.constant 0 : i32
    %c0_i32_1 = arith.constant 0 : i32
    return %c0_i32, %c0_i32_0 : i32, i32
  }
  func.func @transform_15(%arg0: i32) -> (i32, i32) {
    %c0_i32 = arith.constant 0 : i32
    %c0_i32_0 = arith.constant 0 : i32
    %c0_i32_1 = arith.constant 0 : i32
    return %c0_i32, %c0_i32_0 : i32, i32
  }
  func.func @transform_16(%arg0: i32) -> (i32, i32) {
    %c0_i32 = arith.constant 0 : i32
    %c0_i32_0 = arith.constant 0 : i32
    %c0_i32_1 = arith.constant 0 : i32
    return %c0_i32, %c0_i32_0 : i32, i32
  }
  func.func @transform_17(%arg0: i32) -> (i32, i32) {
    %c0_i32 = arith.constant 0 : i32
    %c0_i32_0 = arith.constant 0 : i32
    return %arg0, %c0_i32 : i32, i32
  }
}

</mosaic_0001>

<llo_original>
// kernel: tpu_custom_call.1
$region0: #{tpu_custom_call.1}
  #allocation0 [shape = 'u32[]', space=smem, size = 0x4, offset = 0x4, fixed_abs, tag = 'smem constant byte address 0x4 - core index']
  #allocation1 [shape = 'u32[144,128]{1,0:T(1,128)}', space=vmem, size = 0x12000, scoped, tag = 'internal scratch']
  %s0 = inlined_call_operand.hbm [shape: f32[8,32], index: 0, kind: input, shape index: {}]
  %s1 = inlined_call_operand.vmem [shape: s32[8,1], index: 1, kind: input, shape index: {}]
  %s2 = inlined_call_operand.hbm [shape: f32[8,32], index: 2, kind: input, shape index: {}]
  %s3 = inlined_call_operand.hbm [shape: f32[32,32], index: 3, kind: input, shape index: {}]
  %s4 = inlined_call_operand.vmem [shape: f32[1,32], index: 4, kind: input, shape index: {}]
  %s5 = inlined_call_operand.hbm [shape: f32[32,32], index: 5, kind: input, shape index: {}]
  %s6 = inlined_call_operand.hbm [shape: f32[1,32], index: 6, kind: input, shape index: {}]
  %s7 = inlined_call_operand.vmem [shape: f32[32,32], index: 7, kind: input, shape index: {}]
  %s8 = inlined_call_operand.hbm [shape: f32[1,32], index: 8, kind: input, shape index: {}]
  %s9 = inlined_call_operand.hbm [shape: f32[32,32], index: 9, kind: input, shape index: {}]
  %s10 = inlined_call_operand.hbm [shape: f32[1,32], index: 10, kind: input, shape index: {}]
  %s11 = inlined_call_operand.hbm [shape: f32[32,32], index: 11, kind: input, shape index: {}]
  %s12 = inlined_call_operand.hbm [shape: f32[1,32], index: 12, kind: input, shape index: {}]
  %s13 = inlined_call_operand.hbm [shape: f32[32,32], index: 13, kind: input, shape index: {}]
  %s14 = inlined_call_operand.hbm [shape: f32[1,32], index: 14, kind: input, shape index: {}]
  %s15 = inlined_call_operand.vmem [shape: f32[32,32], index: 15, kind: input, shape index: {}]
  %s16 = inlined_call_operand.vmem [shape: f32[1,32], index: 16, kind: input, shape index: {}]
  %s17 = inlined_call_operand.hbm [shape: f32[8,32], index: 17, kind: output, shape index: {}]
  %s18 = sld [smem:[#allocation0]]
  $region126: #{tpu_custom_call.1} parent=0
    _
  %s20 = ssub.s32 1, %s18
  %s21 = scalar_select 0, %s20, %s18
  $region1: #{tpu_custom_call.1} parent=0
    #allocation2 [shape = 'u8[4096]{0}', space=vmem, size = 0x1000, scoped, tag = 'input window, operand 0, single buffered']
    #allocation3 [shape = 's32[1]{0}', space=sflag, size = 0x4, scoped, tag = 'scoped memory for tpu_custom_call.1']
    #allocation4 [shape = 's32[1]{0}', space=sflag, size = 0x4, scoped, tag = 'scoped memory for tpu_custom_call.1']
    #allocation5 [shape = 'u8[4096]{0}', space=vmem, size = 0x1000, scoped, tag = 'input window, operand 2, single buffered']
    #allocation6 [shape = 's32[1]{0}', space=sflag, size = 0x4, scoped, tag = 'scoped memory for tpu_custom_call.1']
    #allocation7 [shape = 'u8[16384]{0}', space=vmem, size = 0x4000, scoped, tag = 'input window, operand 3, single buffered']
    #allocation8 [shape = 'u8[16384]{0}', space=vmem, size = 0x4000, scoped, tag = 'input window, operand 5, single buffered']
    #allocation9 [shape = 's32[1]{0}', space=sflag, size = 0x4, scoped, tag = 'scoped memory for tpu_custom_call.1']
    #allocation10 [shape = 'u8[512]{0}', space=vmem, size = 0x400, scoped, tag = 'input window, operand 6, single buffered']
    #allocation11 [shape = 'u8[512]{0}', space=vmem, size = 0x400, scoped, tag = 'input window, operand 8, single buffered']
    #allocation12 [shape = 's32[1]{0}', space=sflag, size = 0x4, scoped, tag = 'scoped memory for tpu_custom_call.1']
    #allocation13 [shape = 'u8[16384]{0}', space=vmem, size = 0x4000, scoped, tag = 'input window, operand 9, single buffered']
    #allocation14 [shape = 'u8[512]{0}', space=vmem, size = 0x400, scoped, tag = 'input window, operand 10, single buffered']
    #allocation15 [shape = 's32[1]{0}', space=sflag, size = 0x4, scoped, tag = 'scoped memory for tpu_custom_call.1']
    #allocation16 [shape = 'u8[16384]{0}', space=vmem, size = 0x4000, scoped, tag = 'input window, operand 11, single buffered']
    #allocation17 [shape = 'u8[512]{0}', space=vmem, size = 0x400, scoped, tag = 'input window, operand 12, single buffered']
    #allocation18 [shape = 's32[1]{0}', space=sflag, size = 0x4, scoped, tag = 'scoped memory for tpu_custom_call.1']
    #allocation19 [shape = 'u8[16384]{0}', space=vmem, size = 0x4000, scoped, tag = 'input window, operand 13, single buffered']
    #allocation20 [shape = 'u8[512]{0}', space=vmem, size = 0x400, scoped, tag = 'input window, operand 14, single buffered']
    #allocation21 [shape = 's32[1]{0}', space=sflag, size = 0x4, scoped, tag = 'scoped memory for tpu_custom_call.1']
    #allocation22 [shape = 'u8[4096]{0}', space=vmem, size = 0x1000, scoped, tag = 'output window, operand 0, single buffered']
    %22 = vsyncpa [#allocation3], 0
    %23 = vsyncpa [#allocation6], 0
    %24 = vsyncpa [#allocation9], 0
    %25 = vsyncpa [#allocation12], 0
    %26 = vsyncpa [#allocation15], 0
    %27 = vsyncpa [#allocation18], 0
    %28 = vsyncpa [#allocation21], 0
    %29 = vsyncpa [#allocation4], 0
    // Predicated region
    $region2: #{tpu_custom_call.1} parent=1 // pred_check
      _
    $region3: #{tpu_custom_call.1} parent=1 // pred_check_branch
      %31 = sbr.rel (0) target = $region5
    $region4: #{tpu_custom_call.1} parent=1 // pred_region
      %s33 = ssub.s32 128, 128
      %34 = vsyncadd [#allocation3], %s33
      %s36 = sshll.u32 [#allocation2], 4
      %s37 = int_to_ptr.vmem [resolvable:$true] %s36
      %39 = dma.hbm_to_vmem [thread:$0]  %s0, 128, %s37, [#allocation3]
    $region5: #{tpu_custom_call.1} parent=1 // pred_fallthru
      _
    // Predicated region
    $region6: #{tpu_custom_call.1} parent=1 // pred_check
      _
    $region7: #{tpu_custom_call.1} parent=1 // pred_check_branch
      %41 = sbr.rel (0) target = $region9
    $region8: #{tpu_custom_call.1} parent=1 // pred_region
      _
    $region9: #{tpu_custom_call.1} parent=1 // pred_fallthru
      _
    // Predicated region
    $region10: #{tpu_custom_call.1} parent=1 // pred_check
      _
    $region11: #{tpu_custom_call.1} parent=1 // pred_check_branch
      %43 = sbr.rel (0) target = $region13
    $region12: #{tpu_custom_call.1} parent=1 // pred_region
      %s45 = ssub.s32 128, 128
      %46 = vsyncadd [#allocation6], %s45
      %s48 = sshll.u32 [#allocation5], 4
      %s49 = int_to_ptr.vmem [resolvable:$true] %s48
      %51 = dma.hbm_to_vmem [thread:$0]  %s2, 128, %s49, [#allocation6]
    $region13: #{tpu_custom_call.1} parent=1 // pred_fallthru
      _
    // Predicated region
    $region14: #{tpu_custom_call.1} parent=1 // pred_check
      _
    $region15: #{tpu_custom_call.1} parent=1 // pred_check_branch
      %53 = sbr.rel (0) target = $region17
    $region16: #{tpu_custom_call.1} parent=1 // pred_region
      %s55 = ssub.s32 512, 512
      %56 = vsyncadd [#allocation6], %s55
      %s57 = sshll.u32 [#allocation7], 4
      %s58 = int_to_ptr.vmem [resolvable:$true] %s57
      %63 = dma.hbm_to_vmem [thread:$0]  %s3, 512, %s58, [#allocation6], 128, 128, 8
    $region17: #{tpu_custom_call.1} parent=1 // pred_fallthru
      _
    // Predicated region
    $region18: #{tpu_custom_call.1} parent=1 // pred_check
      _
    $region19: #{tpu_custom_call.1} parent=1 // pred_check_branch
      %65 = sbr.rel (0) target = $region21
    $region20: #{tpu_custom_call.1} parent=1 // pred_region
      _
    $region21: #{tpu_custom_call.1} parent=1 // pred_fallthru
      _
    // Predicated region
    $region22: #{tpu_custom_call.1} parent=1 // pred_check
      _
    $region23: #{tpu_custom_call.1} parent=1 // pred_check_branch
      %67 = sbr.rel (0) target = $region25
    $region24: #{tpu_custom_call.1} parent=1 // pred_region
      %s69 = ssub.s32 512, 512
      %70 = vsyncadd [#allocation9], %s69
      %s71 = sshll.u32 [#allocation8], 4
      %s72 = int_to_ptr.vmem [resolvable:$true] %s71
      %77 = dma.hbm_to_vmem [thread:$0]  %s5, 512, %s72, [#allocation9], 128, 128, 8
    $region25: #{tpu_custom_call.1} parent=1 // pred_fallthru
      _
    // Predicated region
    $region26: #{tpu_custom_call.1} parent=1 // pred_check
      _
    $region27: #{tpu_custom_call.1} parent=1 // pred_check_branch
      %79 = sbr.rel (0) target = $region29
    $region28: #{tpu_custom_call.1} parent=1 // pred_region
      %s81 = ssub.s32 16, 16
      %82 = vsyncadd [#allocation9], %s81
      %s84 = sshll.u32 [#allocation10], 4
      %s85 = int_to_ptr.vmem [resolvable:$true] %s84
      %87 = dma.hbm_to_vmem [thread:$0]  %s6, 16, %s85, [#allocation9]
    $region29: #{tpu_custom_call.1} parent=1 // pred_fallthru
      _
    // Predicated region
    $region30: #{tpu_custom_call.1} parent=1 // pred_check
      _
    $region31: #{tpu_custom_call.1} parent=1 // pred_check_branch
      %89 = sbr.rel (0) target = $region33
    $region32: #{tpu_custom_call.1} parent=1 // pred_region
      _
    $region33: #{tpu_custom_call.1} parent=1 // pred_fallthru
      _
    // Predicated region
    $region34: #{tpu_custom_call.1} parent=1 // pred_check
      _
    $region35: #{tpu_custom_call.1} parent=1 // pred_check_branch
      %91 = sbr.rel (0) target = $region37
    $region36: #{tpu_custom_call.1} parent=1 // pred_region
      %s93 = ssub.s32 16, 16
      %94 = vsyncadd [#allocation12], %s93
      %s96 = sshll.u32 [#allocation11], 4
      %s97 = int_to_ptr.vmem [resolvable:$true] %s96
      %99 = dma.hbm_to_vmem [thread:$0]  %s8, 16, %s97, [#allocation12]
    $region37: #{tpu_custom_call.1} parent=1 // pred_fallthru
      _
    // Predicated region
    $region38: #{tpu_custom_call.1} parent=1 // pred_check
      _
    $region39: #{tpu_custom_call.1} parent=1 // pred_check_branch
      %101 = sbr.rel (0) target = $region41
    $region40: #{tpu_custom_call.1} parent=1 // pred_region
      %s103 = ssub.s32 512, 512
      %104 = vsyncadd [#allocation12], %s103
      %s105 = sshll.u32 [#allocation13], 4
      %s106 = int_to_ptr.vmem [resolvable:$true] %s105
      %111 = dma.hbm_to_vmem [thread:$0]  %s9, 512, %s106, [#allocation12], 128, 128, 8
    $region41: #{tpu_custom_call.1} parent=1 // pred_fallthru
      _
    // Predicated region
    $region42: #{tpu_custom_call.1} parent=1 // pred_check
      _
    $region43: #{tpu_custom_call.1} parent=1 // pred_check_branch
      %113 = sbr.rel (0) target = $region45
    $region44: #{tpu_custom_call.1} parent=1 // pred_region
      %s115 = ssub.s32 16, 16
      %116 = vsyncadd [#allocation15], %s115
      %s118 = sshll.u32 [#allocation14], 4
      %s119 = int_to_ptr.vmem [resolvable:$true] %s118
      %121 = dma.hbm_to_vmem [thread:$0]  %s10, 16, %s119, [#allocation15]
    $region45: #{tpu_custom_call.1} parent=1 // pred_fallthru
      _
    // Predicated region
    $region46: #{tpu_custom_call.1} parent=1 // pred_check
      _
    $region47: #{tpu_custom_call.1} parent=1 // pred_check_branch
      %123 = sbr.rel (0) target = $region49
    $region48: #{tpu_custom_call.1} parent=1 // pred_region
      %s125 = ssub.s32 512, 512
      %126 = vsyncadd [#allocation15], %s125
      %s127 = sshll.u32 [#allocation16], 4
      %s128 = int_to_ptr.vmem [resolvable:$true] %s127
      %133 = dma.hbm_to_vmem [thread:$0]  %s11, 512, %s128, [#allocation15], 128, 128, 8
    $region49: #{tpu_custom_call.1} parent=1 // pred_fallthru
      _
    // Predicated region
    $region50: #{tpu_custom_call.1} parent=1 // pred_check
      _
    $region51: #{tpu_custom_call.1} parent=1 // pred_check_branch
      %135 = sbr.rel (0) target = $region53
    $region52: #{tpu_custom_call.1} parent=1 // pred_region
      %s137 = ssub.s32 16, 16
      %138 = vsyncadd [#allocation18], %s137
      %s140 = sshll.u32 [#allocation17], 4
      %s141 = int_to_ptr.vmem [resolvable:$true] %s140
      %143 = dma.hbm_to_vmem [thread:$0]  %s12, 16, %s141, [#allocation18]
    $region53: #{tpu_custom_call.1} parent=1 // pred_fallthru
      _
    // Predicated region
    $region54: #{tpu_custom_call.1} parent=1 // pred_check
      _
    $region55: #{tpu_custom_call.1} parent=1 // pred_check_branch
      %145 = sbr.rel (0) target = $region57
    $region56: #{tpu_custom_call.1} parent=1 // pred_region
      %s147 = ssub.s32 512, 512
      %148 = vsyncadd [#allocation18], %s147
      %s149 = sshll.u32 [#allocation19], 4
      %s150 = int_to_ptr.vmem [resolvable:$true] %s149
      %155 = dma.hbm_to_vmem [thread:$0]  %s13, 512, %s150, [#allocation18], 128, 128, 8
    $region57: #{tpu_custom_call.1} parent=1 // pred_fallthru
      _
    // Predicated region
    $region58: #{tpu_custom_call.1} parent=1 // pred_check
      _
    $region59: #{tpu_custom_call.1} parent=1 // pred_check_branch
      %157 = sbr.rel (0) target = $region61
    $region60: #{tpu_custom_call.1} parent=1 // pred_region
      %s159 = ssub.s32 16, 16
      %160 = vsyncadd [#allocation21], %s159
      %s162 = sshll.u32 [#allocation20], 4
      %s163 = int_to_ptr.vmem [resolvable:$true] %s162
      %165 = dma.hbm_to_vmem [thread:$0]  %s14, 16, %s163, [#allocation21]
    $region61: #{tpu_custom_call.1} parent=1 // pred_fallthru
      _
    // Predicated region
    $region62: #{tpu_custom_call.1} parent=1 // pred_check
      _
    $region63: #{tpu_custom_call.1} parent=1 // pred_check_branch
      %167 = sbr.rel (0) target = $region65
    $region64: #{tpu_custom_call.1} parent=1 // pred_region
      _
    $region65: #{tpu_custom_call.1} parent=1 // pred_fallthru
      _
    // Predicated region
    $region66: #{tpu_custom_call.1} parent=1 // pred_check
      _
    $region67: #{tpu_custom_call.1} parent=1 // pred_check_branch
      %169 = sbr.rel (0) target = $region69
    $region68: #{tpu_custom_call.1} parent=1 // pred_region
      _
    $region69: #{tpu_custom_call.1} parent=1 // pred_fallthru
      _
    // Predicated region
    $region70: #{tpu_custom_call.1} parent=1 // pred_check
      _
    $region71: #{tpu_custom_call.1} parent=1 // pred_check_branch
      %171 = sbr.rel (0) target = $region73
    $region72: #{tpu_custom_call.1} parent=1 // pred_region
      %172 = dma.done [#allocation3], 128
    $region73: #{tpu_custom_call.1} parent=1 // pred_fallthru
      _
    // Predicated region
    $region74: #{tpu_custom_call.1} parent=1 // pred_check
      _
    $region75: #{tpu_custom_call.1} parent=1 // pred_check_branch
      %174 = sbr.rel (0) target = $region77
    $region76: #{tpu_custom_call.1} parent=1 // pred_region
      %175 = dma.done [#allocation6], 128
    $region77: #{tpu_custom_call.1} parent=1 // pred_fallthru
      _
    // Predicated region
    $region78: #{tpu_custom_call.1} parent=1 // pred_check
      _
    $region79: #{tpu_custom_call.1} parent=1 // pred_check_branch
      %177 = sbr.rel (0) target = $region81
    $region80: #{tpu_custom_call.1} parent=1 // pred_region
      %178 = dma.done [#allocation6], 512
    $region81: #{tpu_custom_call.1} parent=1 // pred_fallthru
      _
    // Predicated region
    $region82: #{tpu_custom_call.1} parent=1 // pred_check
      _
    $region83: #{tpu_custom_call.1} parent=1 // pred_check_branch
      %180 = sbr.rel (0) target = $region85
    $region84: #{tpu_custom_call.1} parent=1 // pred_region
      %181 = dma.done [#allocation9], 512
    $region85: #{tpu_custom_call.1} parent=1 // pred_fallthru
      _
    // Predicated region
    $region86: #{tpu_custom_call.1} parent=1 // pred_check
      _
    $region87: #{tpu_custom_call.1} parent=1 // pred_check_branch
      %183 = sbr.rel (0) target = $region89
    $region88: #{tpu_custom_call.1} parent=1 // pred_region
      %184 = dma.done [#allocation9], 16
    $region89: #{tpu_custom_call.1} parent=1 // pred_fallthru
      _
    // Predicated region
    $region90: #{tpu_custom_call.1} parent=1 // pred_check
      _
    $region91: #{tpu_custom_call.1} parent=1 // pred_check_branch
      %186 = sbr.rel (0) target = $region93
    $region92: #{tpu_custom_call.1} parent=1 // pred_region
      %187 = dma.done [#allocation12], 16
    $region93: #{tpu_custom_call.1} parent=1 // pred_fallthru
      _
    // Predicated region
    $region94: #{tpu_custom_call.1} parent=1 // pred_check
      _
    $region95: #{tpu_custom_call.1} parent=1 // pred_check_branch
      %189 = sbr.rel (0) target = $region97
    $region96: #{tpu_custom_call.1} parent=1 // pred_region
      %190 = dma.done [#allocation12], 512
    $region97: #{tpu_custom_call.1} parent=1 // pred_fallthru
      _
    // Predicated region
    $region98: #{tpu_custom_call.1} parent=1 // pred_check
      _
    $region99: #{tpu_custom_call.1} parent=1 // pred_check_branch
      %192 = sbr.rel (0) target = $region101
    $region100: #{tpu_custom_call.1} parent=1 // pred_region
      %193 = dma.done [#allocation15], 16
    $region101: #{tpu_custom_call.1} parent=1 // pred_fallthru
      _
    // Predicated region
    $region102: #{tpu_custom_call.1} parent=1 // pred_check
      _
    $region103: #{tpu_custom_call.1} parent=1 // pred_check_branch
      %195 = sbr.rel (0) target = $region105
    $region104: #{tpu_custom_call.1} parent=1 // pred_region
      %196 = dma.done [#allocation15], 512
    $region105: #{tpu_custom_call.1} parent=1 // pred_fallthru
      _
    // Predicated region
    $region106: #{tpu_custom_call.1} parent=1 // pred_check
      _
    $region107: #{tpu_custom_call.1} parent=1 // pred_check_branch
      %198 = sbr.rel (0) target = $region109
    $region108: #{tpu_custom_call.1} parent=1 // pred_region
      %199 = dma.done [#allocation18], 16
    $region109: #{tpu_custom_call.1} parent=1 // pred_fallthru
      _
    // Predicated region
    $region110: #{tpu_custom_call.1} parent=1 // pred_check
      _
    $region111: #{tpu_custom_call.1} parent=1 // pred_check_branch
      %201 = sbr.rel (0) target = $region113
    $region112: #{tpu_custom_call.1} parent=1 // pred_region
      %202 = dma.done [#allocation18], 512
    $region113: #{tpu_custom_call.1} parent=1 // pred_fallthru
      _
    // Predicated region
    $region114: #{tpu_custom_call.1} parent=1 // pred_check
      _
    $region115: #{tpu_custom_call.1} parent=1 // pred_check_branch
      %204 = sbr.rel (0) target = $region117
    $region116: #{tpu_custom_call.1} parent=1 // pred_region
      %205 = dma.done [#allocation21], 16
    $region117: #{tpu_custom_call.1} parent=1 // pred_fallthru
      _
    %v206 = vld [vmem:[#allocation2] sm:$0xff]
    %v207 = vld [vmem:[#allocation7] sm:$0xff]
    %v208 = vld [vmem:[#allocation7 + $0x8] sm:$0xff]
    %v209 = vld [vmem:[#allocation7 + $0x10] sm:$0xff]
    %v210 = vld [vmem:[#allocation7 + $0x18] sm:$0xff]
    %v211 = vld [vmem:[#allocation5] sm:$0xff]
    %v212 = vld [vmem:[#allocation8] sm:$0xff]
    %v213 = vld [vmem:[#allocation8 + $0x8] sm:$0xff]
    %v214 = vld [vmem:[#allocation8 + $0x10] sm:$0xff]
    %v215 = vld [vmem:[#allocation8 + $0x18] sm:$0xff]
    %vm216 = vcmask 261120
    %v218 = vsel %vm216, %v211, 0
    %220 = vmatprep.subr.mxu0 0.0
    %221 = vmatpush1.msra.mxu0 %v212
    %222 = vmatprep.subr.mxu0 0.0
    %223 = vmatpush1.msra.mxu0 %v213
    %224 = vmatprep.subr.mxu0 0.0
    %225 = vmatpush1.msra.mxu0 %v214
    %226 = vmatprep.subr.mxu0 0.0
    %227 = vmatpush1.msra.mxu0 %v215
    %228 = vmatprep.subr.mxu0 0.0
    %229 = vmatpush1.msra.mxu0 0.0
    %230 = vmatprep.subr.mxu0 0.0
    %231 = vmatpush1.msra.mxu0 0.0
    %232 = vmatprep.subr.mxu0 0.0
    %233 = vmatpush1.msra.mxu0 0.0
    %234 = vmatprep.subr.mxu0 0.0
    %235 = vmatpush1.msra.mxu0 0.0
    %236 = vmatprep.subr.mxu0 0.0
    %237 = vmatpush1.msra.mxu0 0.0
    %238 = vmatprep.subr.mxu0 0.0
    %239 = vmatpush1.msra.mxu0 0.0
    %240 = vmatprep.subr.mxu0 0.0
    %241 = vmatpush1.msra.mxu0 0.0
    %242 = vmatprep.subr.mxu0 0.0
    %243 = vmatpush1.msra.mxu0 0.0
    %244 = vmatprep.subr.mxu0 0.0
    %245 = vmatpush1.msra.mxu0 0.0
    %246 = vmatprep.subr.mxu0 0.0
    %247 = vmatpush1.msra.mxu0 0.0
    %248 = vmatprep.subr.mxu0 0.0
    %249 = vmatpush1.msra.mxu0 0.0
    %250 = vmatprep.subr.mxu0 0.0
    %251 = vmatpush1.msra.mxu0 0.0
    %252 = vmatprep.subr.mxu0 0.0
    %253 = vmatpush1.msra.mxu0 0.0
    %254 = vmatprep.subr.mxu0 0.0
    %255 = vmatpush1.msra.mxu0 0.0
    %256 = vmatprep.subr.mxu0 0.0
    %257 = vmatpush1.msra.mxu0 0.0
    %258 = vmatprep.subr.mxu0 0.0
    %259 = vmatpush1.msra.mxu0 0.0
    %260 = vmatprep.subr.mxu0 0.0
    %261 = vmatpush1.msra.mxu0 0.0
    %262 = vmatprep.subr.mxu0 0.0
    %263 = vmatpush1.msra.mxu0 0.0
    %264 = vmatprep.subr.mxu0 0.0
    %265 = vmatpush1.msra.mxu0 0.0
    %266 = vmatprep.subr.mxu0 0.0
    %267 = vmatpush1.msra.mxu0 0.0
    %268 = vmatprep.subr.mxu0 0.0
    %269 = vmatpush1.msra.mxu0 0.0
    %270 = vmatprep.subr.mxu0 0.0
    %271 = vmatpush1.msra.mxu0 0.0
    %272 = vmatprep.subr.mxu0 0.0
    %273 = vmatpush1.msra.mxu0 0.0
    %274 = vmatprep.subr.mxu0 0.0
    %275 = vmatpush1.msra.mxu0 0.0
    %276 = vmatprep.subr.mxu0 0.0
    %277 = vmatpush1.msra.mxu0 0.0
    %278 = vmatprep.subr.mxu0 0.0
    %279 = vmatpush1.msra.mxu0 0.0
    %280 = vmatprep.subr.mxu0 0.0
    %281 = vmatpush1.msra.mxu0 0.0
    %282 = vmatprep.subr.mxu0 0.0
    %283 = vmatpush1.msra.mxu0 0.0
    %284 = vmatprep.mubr.f32.mxu0 0.0
    %285 = vmatmul.mubr.f32.gmra.mrb[0].mxu0 %v218
    %v286 = vpop.f32.mrb[0].mxu0
    %v287 = vadd.f32 0.0, %v286
    %v288 = vpop.f32.mrb[0].mxu0
    %289 = vdwg.mxu0
    %v291 = vsel %vm216, %v206, 0
    %293 = vmatprep.subr.mxu0 0.0
    %294 = vmatpush1.msra.mxu0 %v207
    %295 = vmatprep.subr.mxu0 0.0
    %296 = vmatpush1.msra.mxu0 %v208
    %297 = vmatprep.subr.mxu0 0.0
    %298 = vmatpush1.msra.mxu0 %v209
    %299 = vmatprep.subr.mxu0 0.0
    %300 = vmatpush1.msra.mxu0 %v210
    %301 = vmatprep.subr.mxu0 0.0
    %302 = vmatpush1.msra.mxu0 0.0
    %303 = vmatprep.subr.mxu0 0.0
    %304 = vmatpush1.msra.mxu0 0.0
    %305 = vmatprep.subr.mxu0 0.0
    %306 = vmatpush1.msra.mxu0 0.0
    %307 = vmatprep.subr.mxu0 0.0
    %308 = vmatpush1.msra.mxu0 0.0
    %309 = vmatprep.subr.mxu0 0.0
    %310 = vmatpush1.msra.mxu0 0.0
    %311 = vmatprep.subr.mxu0 0.0
    %312 = vmatpush1.msra.mxu0 0.0
    %313 = vmatprep.subr.mxu0 0.0
    %314 = vmatpush1.msra.mxu0 0.0
    %315 = vmatprep.subr.mxu0 0.0
    %316 = vmatpush1.msra.mxu0 0.0
    %317 = vmatprep.subr.mxu0 0.0
    %318 = vmatpush1.msra.mxu0 0.0
    %319 = vmatprep.subr.mxu0 0.0
    %320 = vmatpush1.msra.mxu0 0.0
    %321 = vmatprep.subr.mxu0 0.0
    %322 = vmatpush1.msra.mxu0 0.0
    %323 = vmatprep.subr.mxu0 0.0
    %324 = vmatpush1.msra.mxu0 0.0
    %325 = vmatprep.subr.mxu0 0.0
    %326 = vmatpush1.msra.mxu0 0.0
    %327 = vmatprep.subr.mxu0 0.0
    %328 = vmatpush1.msra.mxu0 0.0
    %329 = vmatprep.subr.mxu0 0.0
    %330 = vmatpush1.msra.mxu0 0.0
    %331 = vmatprep.subr.mxu0 0.0
    %332 = vmatpush1.msra.mxu0 0.0
    %333 = vmatprep.subr.mxu0 0.0
    %334 = vmatpush1.msra.mxu0 0.0
    %335 = vmatprep.subr.mxu0 0.0
    %336 = vmatpush1.msra.mxu0 0.0
    %337 = vmatprep.subr.mxu0 0.0
    %338 = vmatpush1.msra.mxu0 0.0
    %339 = vmatprep.subr.mxu0 0.0
    %340 = vmatpush1.msra.mxu0 0.0
    %341 = vmatprep.subr.mxu0 0.0
    %342 = vmatpush1.msra.mxu0 0.0
    %343 = vmatprep.subr.mxu0 0.0
    %344 = vmatpush1.msra.mxu0 0.0
    %345 = vmatprep.subr.mxu0 0.0
    %346 = vmatpush1.msra.mxu0 0.0
    %347 = vmatprep.subr.mxu0 0.0
    %348 = vmatpush1.msra.mxu0 0.0
    %349 = vmatprep.subr.mxu0 0.0
    %350 = vmatpush1.msra.mxu0 0.0
    %351 = vmatprep.subr.mxu0 0.0
    %352 = vmatpush1.msra.mxu0 0.0
    %353 = vmatprep.subr.mxu0 0.0
    %354 = vmatpush1.msra.mxu0 0.0
    %355 = vmatprep.subr.mxu0 0.0
    %356 = vmatpush1.msra.mxu0 0.0
    %357 = vmatprep.mubr.f32.mxu0 0.0
    %358 = vmatmul.mubr.f32.gmra.mrb[0].mxu0 %v291
    %v359 = vpop.f32.mrb[0].mxu0
    %v360 = vadd.f32 %v287, %v359
    %v361 = vpop.f32.mrb[0].mxu0
    %362 = vdwg.mxu0
    %v363 = vld [vmem:[%s1] sm:$0xff]
    %v364 = vcvt.s32.f32 %v363
    %v365 = vmul.f32 %v364, 0.02
    %v366 = vld [vmem:[%s4] sm:$0x1]
    %368 = vset.pattern.permute.xlu0 0
    %369 = vperm.xlu0 %368, %v365
    %v370 = vpop.permute.xlu0 %369
    %v373 = vlaneseq
    %v374 = vshrl.u32 %v373, 7
    %v375 = vsub.s32 0, %v374
    %v376 = vrot.slane %v366, %v375
    %v378 = vmul.f32 %v370, %v376
    %v379 = vadd.f32 %v360, %v378
    %v380 = vld [vmem:[#allocation10] sm:$0x1]
    %v382 = vlaneseq
    %v383 = vshrl.u32 %v382, 7
    %v384 = vsub.s32 0, %v383
    %v385 = vrot.slane %v380, %v384
    %v387 = vadd.f32 %v379, %v385
    %vm388 = vcmp.gt.f32.partialorder %v387, 0.0
    %v389 = vmul.f32 %v387, 0.1
    %v390 = vsel %vm388, %v387, %v389
    %v391 = vld [vmem:[%s7] sm:$0xff]
    %v392 = vld [vmem:[%s7 + $0x8] sm:$0xff]
    %v393 = vld [vmem:[%s7 + $0x10] sm:$0xff]
    %v394 = vld [vmem:[%s7 + $0x18] sm:$0xff]
    %v395 = vld [vmem:[#allocation11] sm:$0x1]
    %v397 = vlaneseq
    %v398 = vshrl.u32 %v397, 7
    %v399 = vsub.s32 0, %v398
    %v400 = vrot.slane %v395, %v399
    %v403 = vsel %vm216, %v390, 0
    %405 = vmatprep.subr.mxu0 0.0
    %406 = vmatpush1.msra.mxu0 %v391
    %407 = vmatprep.subr.mxu0 0.0
    %408 = vmatpush1.msra.mxu0 %v392
    %409 = vmatprep.subr.mxu0 0.0
    %410 = vmatpush1.msra.mxu0 %v393
    %411 = vmatprep.subr.mxu0 0.0
    %412 = vmatpush1.msra.mxu0 %v394
    %413 = vmatprep.subr.mxu0 0.0
    %414 = vmatpush1.msra.mxu0 0.0
    %415 = vmatprep.subr.mxu0 0.0
    %416 = vmatpush1.msra.mxu0 0.0
    %417 = vmatprep.subr.mxu0 0.0
    %418 = vmatpush1.msra.mxu0 0.0
    %419 = vmatprep.subr.mxu0 0.0
    %420 = vmatpush1.msra.mxu0 0.0
    %421 = vmatprep.subr.mxu0 0.0
    %422 = vmatpush1.msra.mxu0 0.0
    %423 = vmatprep.subr.mxu0 0.0
    %424 = vmatpush1.msra.mxu0 0.0
    %425 = vmatprep.subr.mxu0 0.0
    %426 = vmatpush1.msra.mxu0 0.0
    %427 = vmatprep.subr.mxu0 0.0
    %428 = vmatpush1.msra.mxu0 0.0
    %429 = vmatprep.subr.mxu0 0.0
    %430 = vmatpush1.msra.mxu0 0.0
    %431 = vmatprep.subr.mxu0 0.0
    %432 = vmatpush1.msra.mxu0 0.0
    %433 = vmatprep.subr.mxu0 0.0
    %434 = vmatpush1.msra.mxu0 0.0
    %435 = vmatprep.subr.mxu0 0.0
    %436 = vmatpush1.msra.mxu0 0.0
    %437 = vmatprep.subr.mxu0 0.0
    %438 = vmatpush1.msra.mxu0 0.0
    %439 = vmatprep.subr.mxu0 0.0
    %440 = vmatpush1.msra.mxu0 0.0
    %441 = vmatprep.subr.mxu0 0.0
    %442 = vmatpush1.msra.mxu0 0.0
    %443 = vmatprep.subr.mxu0 0.0
    %444 = vmatpush1.msra.mxu0 0.0
    %445 = vmatprep.subr.mxu0 0.0
    %446 = vmatpush1.msra.mxu0 0.0
    %447 = vmatprep.subr.mxu0 0.0
    %448 = vmatpush1.msra.mxu0 0.0
    %449 = vmatprep.subr.mxu0 0.0
    %450 = vmatpush1.msra.mxu0 0.0
    %451 = vmatprep.subr.mxu0 0.0
    %452 = vmatpush1.msra.mxu0 0.0
    %453 = vmatprep.subr.mxu0 0.0
    %454 = vmatpush1.msra.mxu0 0.0
    %455 = vmatprep.subr.mxu0 0.0
    %456 = vmatpush1.msra.mxu0 0.0
    %457 = vmatprep.subr.mxu0 0.0
    %458 = vmatpush1.msra.mxu0 0.0
    %459 = vmatprep.subr.mxu0 0.0
    %460 = vmatpush1.msra.mxu0 0.0
    %461 = vmatprep.subr.mxu0 0.0
    %462 = vmatpush1.msra.mxu0 0.0
    %463 = vmatprep.subr.mxu0 0.0
    %464 = vmatpush1.msra.mxu0 0.0
    %465 = vmatprep.subr.mxu0 0.0
    %466 = vmatpush1.msra.mxu0 0.0
    %467 = vmatprep.subr.mxu0 0.0
    %468 = vmatpush1.msra.mxu0 0.0
    %469 = vmatprep.mubr.f32.mxu0 0.0
    %470 = vmatmul.mubr.f32.gmra.mrb[0].mxu0 %v403
    %v471 = vpop.f32.mrb[0].mxu0
    %v472 = vadd.f32 %v400, %v471
    %v473 = vpop.f32.mrb[0].mxu0
    %474 = vdwg.mxu0
    %vm475 = vcmp.gt.f32.partialorder %v472, 0.0
    %v476 = vmul.f32 %v472, 0.1
    %v477 = vsel %vm475, %v472, %v476
    %v478 = vld [vmem:[#allocation13] sm:$0xff]
    %v479 = vld [vmem:[#allocation13 + $0x8] sm:$0xff]
    %v480 = vld [vmem:[#allocation13 + $0x10] sm:$0xff]
    %v481 = vld [vmem:[#allocation13 + $0x18] sm:$0xff]
    %v482 = vld [vmem:[#allocation14] sm:$0x1]
    %v484 = vlaneseq
    %v485 = vshrl.u32 %v484, 7
    %v486 = vsub.s32 0, %v485
    %v487 = vrot.slane %v482, %v486
    %v490 = vsel %vm216, %v477, 0
    %492 = vmatprep.subr.mxu0 0.0
    %493 = vmatpush1.msra.mxu0 %v478
    %494 = vmatprep.subr.mxu0 0.0
    %495 = vmatpush1.msra.mxu0 %v479
    %496 = vmatprep.subr.mxu0 0.0
    %497 = vmatpush1.msra.mxu0 %v480
    %498 = vmatprep.subr.mxu0 0.0
    %499 = vmatpush1.msra.mxu0 %v481
    %500 = vmatprep.subr.mxu0 0.0
    %501 = vmatpush1.msra.mxu0 0.0
    %502 = vmatprep.subr.mxu0 0.0
    %503 = vmatpush1.msra.mxu0 0.0
    %504 = vmatprep.subr.mxu0 0.0
    %505 = vmatpush1.msra.mxu0 0.0
    %506 = vmatprep.subr.mxu0 0.0
    %507 = vmatpush1.msra.mxu0 0.0
    %508 = vmatprep.subr.mxu0 0.0
    %509 = vmatpush1.msra.mxu0 0.0
    %510 = vmatprep.subr.mxu0 0.0
    %511 = vmatpush1.msra.mxu0 0.0
    %512 = vmatprep.subr.mxu0 0.0
    %513 = vmatpush1.msra.mxu0 0.0
    %514 = vmatprep.subr.mxu0 0.0
    %515 = vmatpush1.msra.mxu0 0.0
    %516 = vmatprep.subr.mxu0 0.0
    %517 = vmatpush1.msra.mxu0 0.0
    %518 = vmatprep.subr.mxu0 0.0
    %519 = vmatpush1.msra.mxu0 0.0
    %520 = vmatprep.subr.mxu0 0.0
    %521 = vmatpush1.msra.mxu0 0.0
    %522 = vmatprep.subr.mxu0 0.0
    %523 = vmatpush1.msra.mxu0 0.0
    %524 = vmatprep.subr.mxu0 0.0
    %525 = vmatpush1.msra.mxu0 0.0
    %526 = vmatprep.subr.mxu0 0.0
    %527 = vmatpush1.msra.mxu0 0.0
    %528 = vmatprep.subr.mxu0 0.0
    %529 = vmatpush1.msra.mxu0 0.0
    %530 = vmatprep.subr.mxu0 0.0
    %531 = vmatpush1.msra.mxu0 0.0
    %532 = vmatprep.subr.mxu0 0.0
    %533 = vmatpush1.msra.mxu0 0.0
    %534 = vmatprep.subr.mxu0 0.0
    %535 = vmatpush1.msra.mxu0 0.0
    %536 = vmatprep.subr.mxu0 0.0
    %537 = vmatpush1.msra.mxu0 0.0
    %538 = vmatprep.subr.mxu0 0.0
    %539 = vmatpush1.msra.mxu0 0.0
    %540 = vmatprep.subr.mxu0 0.0
    %541 = vmatpush1.msra.mxu0 0.0
    %542 = vmatprep.subr.mxu0 0.0
    %543 = vmatpush1.msra.mxu0 0.0
    %544 = vmatprep.subr.mxu0 0.0
    %545 = vmatpush1.msra.mxu0 0.0
    %546 = vmatprep.subr.mxu0 0.0
    %547 = vmatpush1.msra.mxu0 0.0
    %548 = vmatprep.subr.mxu0 0.0
    %549 = vmatpush1.msra.mxu0 0.0
    %550 = vmatprep.subr.mxu0 0.0
    %551 = vmatpush1.msra.mxu0 0.0
    %552 = vmatprep.subr.mxu0 0.0
    %553 = vmatpush1.msra.mxu0 0.0
    %554 = vmatprep.subr.mxu0 0.0
    %555 = vmatpush1.msra.mxu0 0.0
    %556 = vmatprep.mubr.f32.mxu0 0.0
    %557 = vmatmul.mubr.f32.gmra.mrb[0].mxu0 %v490
    %v558 = vpop.f32.mrb[0].mxu0
    %v559 = vadd.f32 %v487, %v558
    %v560 = vpop.f32.mrb[0].mxu0
    %561 = vdwg.mxu0
    %vm562 = vcmp.gt.f32.partialorder %v559, 0.0
    %v563 = vmul.f32 %v559, 0.1
    %v564 = vsel %vm562, %v559, %v563
    %v565 = vld [vmem:[#allocation16] sm:$0xff]
    %v566 = vld [vmem:[#allocation16 + $0x8] sm:$0xff]
    %v567 = vld [vmem:[#allocation16 + $0x10] sm:$0xff]
    %v568 = vld [vmem:[#allocation16 + $0x18] sm:$0xff]
    %v569 = vld [vmem:[#allocation17] sm:$0x1]
    %v571 = vlaneseq
    %v572 = vshrl.u32 %v571, 7
    %v573 = vsub.s32 0, %v572
    %v574 = vrot.slane %v569, %v573
    %v577 = vsel %vm216, %v564, 0
    %579 = vmatprep.subr.mxu0 0.0
    %580 = vmatpush1.msra.mxu0 %v565
    %581 = vmatprep.subr.mxu0 0.0
    %582 = vmatpush1.msra.mxu0 %v566
    %583 = vmatprep.subr.mxu0 0.0
    %584 = vmatpush1.msra.mxu0 %v567
    %585 = vmatprep.subr.mxu0 0.0
    %586 = vmatpush1.msra.mxu0 %v568
    %587 = vmatprep.subr.mxu0 0.0
    %588 = vmatpush1.msra.mxu0 0.0
    %589 = vmatprep.subr.mxu0 0.0
    %590 = vmatpush1.msra.mxu0 0.0
    %591 = vmatprep.subr.mxu0 0.0
    %592 = vmatpush1.msra.mxu0 0.0
    %593 = vmatprep.subr.mxu0 0.0
    %594 = vmatpush1.msra.mxu0 0.0
    %595 = vmatprep.subr.mxu0 0.0
    %596 = vmatpush1.msra.mxu0 0.0
    %597 = vmatprep.subr.mxu0 0.0
    %598 = vmatpush1.msra.mxu0 0.0
    %599 = vmatprep.subr.mxu0 0.0
    %600 = vmatpush1.msra.mxu0 0.0
    %601 = vmatprep.subr.mxu0 0.0
    %602 = vmatpush1.msra.mxu0 0.0
    %603 = vmatprep.subr.mxu0 0.0
    %604 = vmatpush1.msra.mxu0 0.0
    %605 = vmatprep.subr.mxu0 0.0
    %606 = vmatpush1.msra.mxu0 0.0
    %607 = vmatprep.subr.mxu0 0.0
    %608 = vmatpush1.msra.mxu0 0.0
    %609 = vmatprep.subr.mxu0 0.0
    %610 = vmatpush1.msra.mxu0 0.0
    %611 = vmatprep.subr.mxu0 0.0
    %612 = vmatpush1.msra.mxu0 0.0
    %613 = vmatprep.subr.mxu0 0.0
    %614 = vmatpush1.msra.mxu0 0.0
    %615 = vmatprep.subr.mxu0 0.0
    %616 = vmatpush1.msra.mxu0 0.0
    %617 = vmatprep.subr.mxu0 0.0
    %618 = vmatpush1.msra.mxu0 0.0
    %619 = vmatprep.subr.mxu0 0.0
    %620 = vmatpush1.msra.mxu0 0.0
    %621 = vmatprep.subr.mxu0 0.0
    %622 = vmatpush1.msra.mxu0 0.0
    %623 = vmatprep.subr.mxu0 0.0
    %624 = vmatpush1.msra.mxu0 0.0
    %625 = vmatprep.subr.mxu0 0.0
    %626 = vmatpush1.msra.mxu0 0.0
    %627 = vmatprep.subr.mxu0 0.0
    %628 = vmatpush1.msra.mxu0 0.0
    %629 = vmatprep.subr.mxu0 0.0
    %630 = vmatpush1.msra.mxu0 0.0
    %631 = vmatprep.subr.mxu0 0.0
    %632 = vmatpush1.msra.mxu0 0.0
    %633 = vmatprep.subr.mxu0 0.0
    %634 = vmatpush1.msra.mxu0 0.0
    %635 = vmatprep.subr.mxu0 0.0
    %636 = vmatpush1.msra.mxu0 0.0
    %637 = vmatprep.subr.mxu0 0.0
    %638 = vmatpush1.msra.mxu0 0.0
    %639 = vmatprep.subr.mxu0 0.0
    %640 = vmatpush1.msra.mxu0 0.0
    %641 = vmatprep.subr.mxu0 0.0
    %642 = vmatpush1.msra.mxu0 0.0
    %643 = vmatprep.mubr.f32.mxu0 0.0
    %644 = vmatmul.mubr.f32.gmra.mrb[0].mxu0 %v577
    %v645 = vpop.f32.mrb[0].mxu0
    %v646 = vadd.f32 %v574, %v645
    %v647 = vpop.f32.mrb[0].mxu0
    %648 = vdwg.mxu0
    %vm649 = vcmp.gt.f32.partialorder %v646, 0.0
    %v650 = vmul.f32 %v646, 0.1
    %v651 = vsel %vm649, %v646, %v650
    %v652 = vld [vmem:[#allocation19] sm:$0xff]
    %v653 = vld [vmem:[#allocation19 + $0x8] sm:$0xff]
    %v654 = vld [vmem:[#allocation19 + $0x10] sm:$0xff]
    %v655 = vld [vmem:[#allocation19 + $0x18] sm:$0xff]
    %v656 = vld [vmem:[#allocation20] sm:$0x1]
    %v658 = vlaneseq
    %v659 = vshrl.u32 %v658, 7
    %v660 = vsub.s32 0, %v659
    %v661 = vrot.slane %v656, %v660
    %v664 = vsel %vm216, %v651, 0
    %666 = vmatprep.subr.mxu0 0.0
    %667 = vmatpush1.msra.mxu0 %v652
    %668 = vmatprep.subr.mxu0 0.0
    %669 = vmatpush1.msra.mxu0 %v653
    %670 = vmatprep.subr.mxu0 0.0
    %671 = vmatpush1.msra.mxu0 %v654
    %672 = vmatprep.subr.mxu0 0.0
    %673 = vmatpush1.msra.mxu0 %v655
    %674 = vmatprep.subr.mxu0 0.0
    %675 = vmatpush1.msra.mxu0 0.0
    %676 = vmatprep.subr.mxu0 0.0
    %677 = vmatpush1.msra.mxu0 0.0
    %678 = vmatprep.subr.mxu0 0.0
    %679 = vmatpush1.msra.mxu0 0.0
    %680 = vmatprep.subr.mxu0 0.0
    %681 = vmatpush1.msra.mxu0 0.0
    %682 = vmatprep.subr.mxu0 0.0
    %683 = vmatpush1.msra.mxu0 0.0
    %684 = vmatprep.subr.mxu0 0.0
    %685 = vmatpush1.msra.mxu0 0.0
    %686 = vmatprep.subr.mxu0 0.0
    %687 = vmatpush1.msra.mxu0 0.0
    %688 = vmatprep.subr.mxu0 0.0
    %689 = vmatpush1.msra.mxu0 0.0
    %690 = vmatprep.subr.mxu0 0.0
    %691 = vmatpush1.msra.mxu0 0.0
    %692 = vmatprep.subr.mxu0 0.0
    %693 = vmatpush1.msra.mxu0 0.0
    %694 = vmatprep.subr.mxu0 0.0
    %695 = vmatpush1.msra.mxu0 0.0
    %696 = vmatprep.subr.mxu0 0.0
    %697 = vmatpush1.msra.mxu0 0.0
    %698 = vmatprep.subr.mxu0 0.0
    %699 = vmatpush1.msra.mxu0 0.0
    %700 = vmatprep.subr.mxu0 0.0
    %701 = vmatpush1.msra.mxu0 0.0
    %702 = vmatprep.subr.mxu0 0.0
    %703 = vmatpush1.msra.mxu0 0.0
    %704 = vmatprep.subr.mxu0 0.0
    %705 = vmatpush1.msra.mxu0 0.0
    %706 = vmatprep.subr.mxu0 0.0
    %707 = vmatpush1.msra.mxu0 0.0
    %708 = vmatprep.subr.mxu0 0.0
    %709 = vmatpush1.msra.mxu0 0.0
    %710 = vmatprep.subr.mxu0 0.0
    %711 = vmatpush1.msra.mxu0 0.0
    %712 = vmatprep.subr.mxu0 0.0
    %713 = vmatpush1.msra.mxu0 0.0
    %714 = vmatprep.subr.mxu0 0.0
    %715 = vmatpush1.msra.mxu0 0.0
    %716 = vmatprep.subr.mxu0 0.0
    %717 = vmatpush1.msra.mxu0 0.0
    %718 = vmatprep.subr.mxu0 0.0
    %719 = vmatpush1.msra.mxu0 0.0
    %720 = vmatprep.subr.mxu0 0.0
    %721 = vmatpush1.msra.mxu0 0.0
    %722 = vmatprep.subr.mxu0 0.0
    %723 = vmatpush1.msra.mxu0 0.0
    %724 = vmatprep.subr.mxu0 0.0
    %725 = vmatpush1.msra.mxu0 0.0
    %726 = vmatprep.subr.mxu0 0.0
    %727 = vmatpush1.msra.mxu0 0.0
    %728 = vmatprep.subr.mxu0 0.0
    %729 = vmatpush1.msra.mxu0 0.0
    %730 = vmatprep.mubr.f32.mxu0 0.0
    %731 = vmatmul.mubr.f32.gmra.mrb[0].mxu0 %v664
    %v732 = vpop.f32.mrb[0].mxu0
    %v733 = vadd.f32 %v661, %v732
    %v734 = vpop.f32.mrb[0].mxu0
    %735 = vdwg.mxu0
    %vm736 = vcmp.gt.f32.partialorder %v733, 0.0
    %v737 = vmul.f32 %v733, 0.1
    %v738 = vsel %vm736, %v733, %v737
    %v739 = vld [vmem:[%s15] sm:$0xff]
    %v740 = vld [vmem:[%s15 + $0x8] sm:$0xff]
    %v741 = vld [vmem:[%s15 + $0x10] sm:$0xff]
    %v742 = vld [vmem:[%s15 + $0x18] sm:$0xff]
    %v743 = vld [vmem:[%s16] sm:$0x1]
    %v745 = vlaneseq
    %v746 = vshrl.u32 %v745, 7
    %v747 = vsub.s32 0, %v746
    %v748 = vrot.slane %v743, %v747
    %v751 = vsel %vm216, %v738, 0
    %753 = vmatprep.subr.mxu0 0.0
    %754 = vmatpush1.msra.mxu0 %v739
    %755 = vmatprep.subr.mxu0 0.0
    %756 = vmatpush1.msra.mxu0 %v740
    %757 = vmatprep.subr.mxu0 0.0
    %758 = vmatpush1.msra.mxu0 %v741
    %759 = vmatprep.subr.mxu0 0.0
    %760 = vmatpush1.msra.mxu0 %v742
    %761 = vmatprep.subr.mxu0 0.0
    %762 = vmatpush1.msra.mxu0 0.0
    %763 = vmatprep.subr.mxu0 0.0
    %764 = vmatpush1.msra.mxu0 0.0
    %765 = vmatprep.subr.mxu0 0.0
    %766 = vmatpush1.msra.mxu0 0.0
    %767 = vmatprep.subr.mxu0 0.0
    %768 = vmatpush1.msra.mxu0 0.0
    %769 = vmatprep.subr.mxu0 0.0
    %770 = vmatpush1.msra.mxu0 0.0
    %771 = vmatprep.subr.mxu0 0.0
    %772 = vmatpush1.msra.mxu0 0.0
    %773 = vmatprep.subr.mxu0 0.0
    %774 = vmatpush1.msra.mxu0 0.0
    %775 = vmatprep.subr.mxu0 0.0
    %776 = vmatpush1.msra.mxu0 0.0
    %777 = vmatprep.subr.mxu0 0.0
    %778 = vmatpush1.msra.mxu0 0.0
    %779 = vmatprep.subr.mxu0 0.0
    %780 = vmatpush1.msra.mxu0 0.0
    %781 = vmatprep.subr.mxu0 0.0
    %782 = vmatpush1.msra.mxu0 0.0
    %783 = vmatprep.subr.mxu0 0.0
    %784 = vmatpush1.msra.mxu0 0.0
    %785 = vmatprep.subr.mxu0 0.0
    %786 = vmatpush1.msra.mxu0 0.0
    %787 = vmatprep.subr.mxu0 0.0
    %788 = vmatpush1.msra.mxu0 0.0
    %789 = vmatprep.subr.mxu0 0.0
    %790 = vmatpush1.msra.mxu0 0.0
    %791 = vmatprep.subr.mxu0 0.0
    %792 = vmatpush1.msra.mxu0 0.0
    %793 = vmatprep.subr.mxu0 0.0
    %794 = vmatpush1.msra.mxu0 0.0
    %795 = vmatprep.subr.mxu0 0.0
    %796 = vmatpush1.msra.mxu0 0.0
    %797 = vmatprep.subr.mxu0 0.0
    %798 = vmatpush1.msra.mxu0 0.0
    %799 = vmatprep.subr.mxu0 0.0
    %800 = vmatpush1.msra.mxu0 0.0
    %801 = vmatprep.subr.mxu0 0.0
    %802 = vmatpush1.msra.mxu0 0.0
    %803 = vmatprep.subr.mxu0 0.0
    %804 = vmatpush1.msra.mxu0 0.0
    %805 = vmatprep.subr.mxu0 0.0
    %806 = vmatpush1.msra.mxu0 0.0
    %807 = vmatprep.subr.mxu0 0.0
    %808 = vmatpush1.msra.mxu0 0.0
    %809 = vmatprep.subr.mxu0 0.0
    %810 = vmatpush1.msra.mxu0 0.0
    %811 = vmatprep.subr.mxu0 0.0
    %812 = vmatpush1.msra.mxu0 0.0
    %813 = vmatprep.subr.mxu0 0.0
    %814 = vmatpush1.msra.mxu0 0.0
    %815 = vmatprep.subr.mxu0 0.0
    %816 = vmatpush1.msra.mxu0 0.0
    %817 = vmatprep.mubr.f32.mxu0 0.0
    %818 = vmatmul.mubr.f32.gmra.mrb[0].mxu0 %v751
    %v819 = vpop.f32.mrb[0].mxu0
    %v820 = vadd.f32 %v748, %v819
    %v821 = vpop.f32.mrb[0].mxu0
    %822 = vdwg.mxu0
    %vm823 = vcmp.gt.f32.partialorder %v820, 0.0
    %v824 = vmul.f32 %v820, 0.1
    %v825 = vsel %vm823, %v820, %v824
    %826 = vst.msk [vmem:[#allocation22] sm:$0xff] %vm216, %v825
    // Predicated region
    $region118: #{tpu_custom_call.1} parent=1 // pred_check
      _
    $region119: #{tpu_custom_call.1} parent=1 // pred_check_branch
      %828 = sbr.rel (0) target = $region121
    $region120: #{tpu_custom_call.1} parent=1 // pred_region
      %s830 = ssub.s32 128, 128
      %831 = vsyncadd [#allocation4], %s830
      %s833 = sshll.u32 [#allocation22], 4
      %s834 = int_to_ptr.vmem [resolvable:$true] %s833
      %836 = dma.vmem_to_hbm [thread:$0]  %s834, 128, %s17, [#allocation4]
    $region121: #{tpu_custom_call.1} parent=1 // pred_fallthru
      _
    // Predicated region
    $region122: #{tpu_custom_call.1} parent=1 // pred_check
      _
    $region123: #{tpu_custom_call.1} parent=1 // pred_check_branch
      %838 = sbr.rel (0) target = $region125
    $region124: #{tpu_custom_call.1} parent=1 // pred_region
      %839 = dma.done [#allocation4], 128
    $region125: #{tpu_custom_call.1} parent=1 // pred_fallthru
      _
    %840 = vsyncpa [#allocation3], 1
    %841 = vsyncpa [#allocation6], 1
    %842 = vsyncpa [#allocation9], 1
    %843 = vsyncpa [#allocation12], 1
    %844 = vsyncpa [#allocation15], 1
    %845 = vsyncpa [#allocation18], 1
    %846 = vsyncpa [#allocation21], 1
    %847 = vsyncpa [#allocation4], 1

</llo_original>
